<compile_context>
chip_gen: v7x
topology: tpu7x:2x2x1
jax: 0.10.0
libtpu: 0.0.40
codegen_flags: <defaults>
</compile_context>

<pallas_src>
import jax
import jax.numpy as jnp
from jax.experimental import pallas as pl
from jax.experimental.pallas import tpu as pltpu

LANE = 128            # TPU vreg lane width
H_CHUNK = 512         # in-kernel hidden-dim chunk (bounds live intermediate)


def _round_up(v, m):
    return ((v + m - 1) // m) * m


def _make_mlp_kernel(h_chunks):
    """h_chunks: static list of (start, size) chunks over the padded hidden dim."""

    def kernel(x_ref, w1_ref, b1_ref, w2_ref, b2_ref, o_ref):
        x = x_ref[...]                                      # (tm, Kp), mm_dtype
        acc = jnp.zeros((x.shape[0], o_ref.shape[1]), jnp.float32)
        for (s, sz) in h_chunks:                            # static unroll
            # First affine on the MXU (f32 accumulate), epilogue on the VPU.
            h = jnp.dot(x, w1_ref[:, s:s + sz],
                        preferred_element_type=jnp.float32)
            h = jnp.maximum(h + b1_ref[:, s:s + sz], 0.0)   # (1, sz) broadcasts
            # Second affine; cast activation back to weight dtype for the MXU.
            acc = acc + jnp.dot(h.astype(w2_ref.dtype), w2_ref[s:s + sz, :],
                                preferred_element_type=jnp.float32)
        o_ref[...] = (acc + b2_ref[...]).astype(o_ref.dtype)

    return kernel


def prepare_mlp_params(w1, b1, w2, b2, *, use_bf16=True, align=LANE):
    """Pad + cast weights ONCE (hoisted out of the per-forward path).

    Weights are stored pre-transposed ([in, out]) relative to PyTorch's
    nn.Linear ([out, in]) so the kernel computes plain x @ W + b.
    Zero-padding keeps the math exact: padded K rows contribute 0, padded
    hidden units are ReLU(0+0)=0, padded output lanes are sliced off.
    """
    K, H = w1.shape
    O = w2.shape[1]
    Kp, Hp, Op = (_round_up(d, align) for d in (K, H, O))
    mm_dtype = jnp.bfloat16 if use_bf16 else jnp.float32

    w1p = w1 if (K == Kp and H == Hp) else jnp.pad(w1, ((0, Kp - K), (0, Hp - H)))
    w2p = w2 if (H == Hp and O == Op) else jnp.pad(w2, ((0, Hp - H), (0, Op - O)))
    w1p = w1p.astype(mm_dtype)
    w2p = w2p.astype(mm_dtype)
    b1p = (b1 if H == Hp else jnp.pad(b1, (0, Hp - H))).reshape(1, Hp).astype(jnp.float32)
    b2p = (b2 if O == Op else jnp.pad(b2, (0, Op - O))).reshape(1, Op).astype(jnp.float32)

    return dict(w1p=w1p, b1p=b1p, w2p=w2p, b2p=b2p,
                K=K, H=H, O=O, Kp=Kp, Hp=Hp, Op=Op, mm_dtype=mm_dtype)


def mlp_forward(x, params):
    """x: [B, K] -> [B, O], using params from prepare_mlp_params."""
    B, K = x.shape
    assert K == params["K"], "input feature dim mismatch"
    Kp, Hp, Op, O = params["Kp"], params["Hp"], params["Op"], params["O"]
    mm_dtype = params["mm_dtype"]
    out_dtype = x.dtype
    mm_itemsize = jnp.dtype(mm_dtype).itemsize
    out_itemsize = jnp.dtype(out_dtype).itemsize

    # ---- hardware-aware sizing --------------------------------------------
    try:
        vmem_cap = int(pltpu.get_tpu_info().vmem_capacity_bytes)
    except Exception:
        vmem_cap = 64 * 1024 * 1024
    small_vmem = vmem_cap <= 80 * 1024 * 1024       # v7x-like (64 MiB per TC)
    tm_cap = 256 if small_vmem else 512             # 512 on 128-MiB v5e/v6e

    if B <= 32:
        tm = _round_up(B, 16)
    else:
        # Guarantee >= 2 grid steps so ("parallel",) can use both v7x cores.
        tm = min(tm_cap, _round_up(-(-B // 2), 16))

    w_bytes = (params["w1p"].size + params["w2p"].size) * mm_itemsize
    b_bytes = (params["b1p"].size + params["b2p"].size) * 4

    def _tile_bytes(t):
        # double-buffered x tile + double-buffered out tile
        return 2 * t * Kp * mm_itemsize + 2 * t * Op * out_itemsize

    budget = int(vmem_cap * 0.6)
    while tm > 16 and w_bytes + b_bytes + _tile_bytes(tm) > budget:
        tm = max(16, _round_up(tm // 2, 16))
    # TODO(synk): if the weights alone exceed the VMEM budget, add an N/K-tiled
    # grid with an f32 accumulator + pl.when init/finalize (needed for very
    # large Hp/Op, especially on v7x's 64 MiB VMEM).

    Bp = _round_up(B, tm)
    grid_m = Bp // tm

    # ---- input padding (conditional no-op when already aligned) ------------
    if Bp != B or Kp != K:
        xp = jnp.pad(x, ((0, Bp - B), (0, Kp - K)))
    else:
        xp = x
    xp = xp.astype(mm_dtype)

    # ---- in-kernel hidden-dim chunking (static) -----------------------------
    h_chunks = [(s, min(H_CHUNK, Hp - s)) for s in range(0, Hp, H_CHUNK)]

    # ---- cost estimate & VMEM limit -----------------------------------------
    cost = pl.CostEstimate(
        flops=2 * Bp * (Kp * Hp + Hp * Op),
        transcendentals=0,
        bytes_accessed=(Bp * Kp + Kp * Hp + Hp * Op) * mm_itemsize
        + (Hp + Op) * 4
        + Bp * Op * out_itemsize,
    )
    vmem_needed = w_bytes + b_bytes + _tile_bytes(tm)
    vmem_limit = max(int(vmem_needed * 1.5) + (2 << 20), 16 << 20)
    vmem_limit = min(vmem_limit, int(vmem_cap * 0.9))

    # ---- build & run ---------------------------------------------------------
    def _build_call(single_buffer_weights):
        def _wspec(shape):
            # Weight-stationary blocks: constant index_map; single-buffer them
            # so they don't occupy 2x their footprint in VMEM.
            if single_buffer_weights and hasattr(pl, "Buffered"):
                return pl.BlockSpec(shape, lambda i: (0,) * len(shape),
                                    pipeline_mode=pl.Buffered(1))
            return pl.BlockSpec(shape, lambda i: (0,) * len(shape))

        return pl.pallas_call(
            _make_mlp_kernel(h_chunks),
            out_shape=jax.ShapeDtypeStruct((Bp, Op), out_dtype),
            grid=(grid_m,),
            in_specs=[
                pl.BlockSpec((tm, Kp), lambda i: (i, 0)),   # batch tile marches
                _wspec((Kp, Hp)),
                _wspec((1, Hp)),
                _wspec((Hp, Op)),
                _wspec((1, Op)),
            ],
            out_specs=pl.BlockSpec((tm, Op), lambda i: (i, 0)),
            compiler_params=pltpu.CompilerParams(
                dimension_semantics=("parallel",),
                vmem_limit_bytes=vmem_limit,
            ),
            cost_estimate=cost,
        )

    def _run(single_buffer_weights):
        call = _build_call(single_buffer_weights)
        return call(xp, params["w1p"], params["b1p"],
                    params["w2p"], params["b2p"])

    try:
        out_padded = _run(True)
    except Exception:
        # Fallback: default double-buffering if Buffered(1) is unsupported.
        out_padded = _run(False)

    # ---- strip padding (conditional no-op) ----------------------------------
    if Bp != B or Op != O:
        return out_padded[:B, :O]
    return out_padded


def init_params(key, input_size, hidden_size, out_size):
    # Deterministic init mimicking nn.Linear (uniform in +/- 1/sqrt(fan_in)).
    k1, k2, k3, k4 = jax.random.split(key, 4)
    lim1 = 1.0 / jnp.sqrt(input_size)
    lim2 = 1.0 / jnp.sqrt(hidden_size)
    # Stored transposed ([in, out]) relative to PyTorch's [out, in].
    w1 = jax.random.uniform(k1, (input_size, hidden_size), jnp.float32, -lim1, lim1)
    b1 = jax.random.uniform(k2, (hidden_size,), jnp.float32, -lim1, lim1)
    w2 = jax.random.uniform(k3, (hidden_size, out_size), jnp.float32, -lim2, lim2)
    b2 = jax.random.uniform(k4, (out_size,), jnp.float32, -lim2, lim2)
    return w1, b1, w2, b2


if __name__ == "__main__":
    input_size, hidden_size, out_size = 32, 64, 16
    batch = 8

    key = jax.random.PRNGKey(0)
    kx, kp = jax.random.split(key)
    x = jax.random.normal(kx, (batch, input_size), jnp.float32)
    w1, b1, w2, b2 = init_params(kp, input_size, hidden_size, out_size)

    # Pad/cast weights once (hoisted), then run the fused kernel.
    params = prepare_mlp_params(w1, b1, w2, b2, use_bf16=True)
    out = mlp_forward(x, params)
    out = jax.block_until_ready(out)
    assert out.shape == (batch, out_size)
    assert out.dtype == x.dtype

    # Reference with the same bf16 rounding of matmul inputs (f32 accumulate),
    # mirroring the kernel's MXU behavior.
    x16 = x.astype(jnp.bfloat16)
    w116 = w1.astype(jnp.bfloat16)
    w216 = w2.astype(jnp.bfloat16)
    h_ref = jnp.maximum(
        jnp.dot(x16, w116, preferred_element_type=jnp.float32) + b1, 0.0)
    ref_bf16 = jnp.dot(h_ref.astype(jnp.bfloat16), w216,
                       preferred_element_type=jnp.float32) + b2
    assert jnp.allclose(out, ref_bf16, atol=2e-3, rtol=2e-3)

    # Loose sanity check against the pure-f32 reference (bf16 rounding error).
    ref_f32 = jnp.maximum(x @ w1 + b1, 0.0) @ w2 + b2
    assert jnp.allclose(out, ref_f32, atol=5e-2, rtol=5e-2)

    print("KERNEL_OK")
</pallas_src>

<mosaic_0001>
module attributes {stable_mosaic.version = 11 : i64} {
  func.func @kernel(%arg0: i32, %arg1: memref<16x128xbf16, #tpu.memory_space<vmem>>, %arg2: memref<128x128xbf16, #tpu.memory_space<vmem>>, %arg3: memref<1x128xf32, #tpu.memory_space<vmem>>, %arg4: memref<128x128xbf16, #tpu.memory_space<vmem>>, %arg5: memref<1x128xf32, #tpu.memory_space<vmem>>, %arg6: memref<16x128xf32, #tpu.memory_space<vmem>>) attributes {dimension_semantics = [#tpu.dimension_semantics<parallel>], iteration_bounds = array<i64: 1>, scalar_prefetch = 0 : i64, scratch_operands = 0 : i64, tpu.core_type = #tpu.core_type<tc>, window_params = [{transform_indices = @transform_0, window_bounds = array<i64: 16, 128>}, {pipeline_mode = #tpu.pipeline_mode<synchronous>, transform_indices = @transform_1, window_bounds = array<i64: 128, 128>}, {pipeline_mode = #tpu.pipeline_mode<synchronous>, transform_indices = @transform_2, window_bounds = array<i64: 1, 128>}, {pipeline_mode = #tpu.pipeline_mode<synchronous>, transform_indices = @transform_3, window_bounds = array<i64: 128, 128>}, {pipeline_mode = #tpu.pipeline_mode<synchronous>, transform_indices = @transform_4, window_bounds = array<i64: 1, 128>}, {transform_indices = @transform_5, window_bounds = array<i64: 16, 128>}]} {
    %c0 = arith.constant 0 : index
    %c0_0 = arith.constant 0 : index
    %0 = vector.load %arg1[%c0, %c0_0] : memref<16x128xbf16, #tpu.memory_space<vmem>>, vector<16x128xbf16>
    %cst = arith.constant 0.000000e+00 : f32
    %1 = vector.broadcast %cst : f32 to vector<16x128xf32>
    %c0_1 = arith.constant 0 : index
    %c0_2 = arith.constant 0 : index
    %2 = vector.load %arg2[%c0_1, %c0_2] : memref<128x128xbf16, #tpu.memory_space<vmem>>, vector<128x128xbf16>
    %cst_3 = arith.constant dense<0.000000e+00> : vector<16x128xf32>
    %3 = tpu.matmul %0, %2, %cst_3 {dimension_numbers = #tpu.dot_dimension_numbers<[1], [0], [0], [1], [0, 0, 1, 1], [], []>} : vector<16x128xbf16>, vector<128x128xbf16>, vector<16x128xf32> -> vector<16x128xf32>
    %c0_4 = arith.constant 0 : index
    %c0_5 = arith.constant 0 : index
    %4 = vector.load %arg3[%c0_4, %c0_5] : memref<1x128xf32, #tpu.memory_space<vmem>>, vector<1x128xf32>
    %5 = vector.broadcast %4 : vector<1x128xf32> to vector<16x128xf32>
    %6 = arith.addf %3, %5 : vector<16x128xf32>
    %cst_6 = arith.constant 0.000000e+00 : f32
    %7 = vector.broadcast %cst_6 : f32 to vector<16x128xf32>
    %8 = arith.maximumf %6, %7 : vector<16x128xf32>
    %9 = arith.truncf %8 : vector<16x128xf32> to vector<16x128xbf16>
    %c0_7 = arith.constant 0 : index
    %c0_8 = arith.constant 0 : index
    %10 = vector.load %arg4[%c0_7, %c0_8] : memref<128x128xbf16, #tpu.memory_space<vmem>>, vector<128x128xbf16>
    %cst_9 = arith.constant dense<0.000000e+00> : vector<16x128xf32>
    %11 = tpu.matmul %9, %10, %cst_9 {dimension_numbers = #tpu.dot_dimension_numbers<[1], [0], [0], [1], [0, 0, 1, 1], [], []>} : vector<16x128xbf16>, vector<128x128xbf16>, vector<16x128xf32> -> vector<16x128xf32>
    %12 = arith.addf %1, %11 : vector<16x128xf32>
    %c0_10 = arith.constant 0 : index
    %c0_11 = arith.constant 0 : index
    %13 = vector.load %arg5[%c0_10, %c0_11] : memref<1x128xf32, #tpu.memory_space<vmem>>, vector<1x128xf32>
    %14 = vector.broadcast %13 : vector<1x128xf32> to vector<16x128xf32>
    %15 = arith.addf %12, %14 : vector<16x128xf32>
    %c0_12 = arith.constant 0 : index
    %c0_13 = arith.constant 0 : index
    %16 = vector.load %arg6[%c0_12, %c0_13] : memref<16x128xf32, #tpu.memory_space<vmem>>, vector<16x128xf32>
    tpu.vector_store %arg6[%c0_12, %c0_13], %15 {strides = array<i32>} : memref<16x128xf32, #tpu.memory_space<vmem>>, vector<16x128xf32>,
    return
  }
  func.func @transform_0(%arg0: i32) -> (i32, i32) {
    %c0_i32 = arith.constant 0 : i32
    %c0_i32_0 = arith.constant 0 : i32
    return %arg0, %c0_i32 : i32, i32
  }
  func.func @transform_1(%arg0: i32) -> (i32, i32) {
    %c0_i32 = arith.constant 0 : i32
    %c0_i32_0 = arith.constant 0 : i32
    %c0_i32_1 = arith.constant 0 : i32
    return %c0_i32, %c0_i32_0 : i32, i32
  }
  func.func @transform_2(%arg0: i32) -> (i32, i32) {
    %c0_i32 = arith.constant 0 : i32
    %c0_i32_0 = arith.constant 0 : i32
    %c0_i32_1 = arith.constant 0 : i32
    return %c0_i32, %c0_i32_0 : i32, i32
  }
  func.func @transform_3(%arg0: i32) -> (i32, i32) {
    %c0_i32 = arith.constant 0 : i32
    %c0_i32_0 = arith.constant 0 : i32
    %c0_i32_1 = arith.constant 0 : i32
    return %c0_i32, %c0_i32_0 : i32, i32
  }
  func.func @transform_4(%arg0: i32) -> (i32, i32) {
    %c0_i32 = arith.constant 0 : i32
    %c0_i32_0 = arith.constant 0 : i32
    %c0_i32_1 = arith.constant 0 : i32
    return %c0_i32, %c0_i32_0 : i32, i32
  }
  func.func @transform_5(%arg0: i32) -> (i32, i32) {
    %c0_i32 = arith.constant 0 : i32
    %c0_i32_0 = arith.constant 0 : i32
    return %arg0, %c0_i32 : i32, i32
  }
}

module attributes {stable_mosaic.version = 11 : i64} {
  func.func @kernel(%arg0: i32, %arg1: memref<16x128xbf16, #tpu.memory_space<vmem>>, %arg2: memref<128x128xbf16, #tpu.memory_space<vmem>>, %arg3: memref<1x128xf32, #tpu.memory_space<vmem>>, %arg4: memref<128x128xbf16, #tpu.memory_space<vmem>>, %arg5: memref<1x128xf32, #tpu.memory_space<vmem>>, %arg6: memref<16x128xf32, #tpu.memory_space<vmem>>) attributes {dimension_semantics = [#tpu.dimension_semantics<parallel>], iteration_bounds = array<i64: 1>, scalar_prefetch = 0 : i64, scratch_operands = 0 : i64, tpu.core_type = #tpu.core_type<tc>, window_params = [{transform_indices = @transform_0, window_bounds = array<i64: 16, 128>}, {pipeline_mode = #tpu.pipeline_mode<synchronous>, transform_indices = @transform_1, window_bounds = array<i64: 128, 128>}, {pipeline_mode = #tpu.pipeline_mode<synchronous>, transform_indices = @transform_2, window_bounds = array<i64: 1, 128>}, {pipeline_mode = #tpu.pipeline_mode<synchronous>, transform_indices = @transform_3, window_bounds = array<i64: 128, 128>}, {pipeline_mode = #tpu.pipeline_mode<synchronous>, transform_indices = @transform_4, window_bounds = array<i64: 1, 128>}, {transform_indices = @transform_5, window_bounds = array<i64: 16, 128>}]} {
    %c0 = arith.constant 0 : index
    %c0_0 = arith.constant 0 : index
    %0 = vector.load %arg1[%c0, %c0_0] : memref<16x128xbf16, #tpu.memory_space<vmem>>, vector<16x128xbf16>
    %cst = arith.constant 0.000000e+00 : f32
    %1 = vector.broadcast %cst : f32 to vector<16x128xf32>
    %c0_1 = arith.constant 0 : index
    %c0_2 = arith.constant 0 : index
    %2 = vector.load %arg2[%c0_1, %c0_2] : memref<128x128xbf16, #tpu.memory_space<vmem>>, vector<128x128xbf16>
    %cst_3 = arith.constant dense<0.000000e+00> : vector<16x128xf32>
    %3 = tpu.matmul %0, %2, %cst_3 {dimension_numbers = #tpu.dot_dimension_numbers<[1], [0], [0], [1], [0, 0, 1, 1], [], []>} : vector<16x128xbf16>, vector<128x128xbf16>, vector<16x128xf32> -> vector<16x128xf32>
    %c0_4 = arith.constant 0 : index
    %c0_5 = arith.constant 0 : index
    %4 = vector.load %arg3[%c0_4, %c0_5] : memref<1x128xf32, #tpu.memory_space<vmem>>, vector<1x128xf32>
    %5 = vector.broadcast %4 : vector<1x128xf32> to vector<16x128xf32>
    %6 = arith.addf %3, %5 : vector<16x128xf32>
    %cst_6 = arith.constant 0.000000e+00 : f32
    %7 = vector.broadcast %cst_6 : f32 to vector<16x128xf32>
    %8 = arith.maximumf %6, %7 : vector<16x128xf32>
    %9 = arith.truncf %8 : vector<16x128xf32> to vector<16x128xbf16>
    %c0_7 = arith.constant 0 : index
    %c0_8 = arith.constant 0 : index
    %10 = vector.load %arg4[%c0_7, %c0_8] : memref<128x128xbf16, #tpu.memory_space<vmem>>, vector<128x128xbf16>
    %cst_9 = arith.constant dense<0.000000e+00> : vector<16x128xf32>
    %11 = tpu.matmul %9, %10, %cst_9 {dimension_numbers = #tpu.dot_dimension_numbers<[1], [0], [0], [1], [0, 0, 1, 1], [], []>} : vector<16x128xbf16>, vector<128x128xbf16>, vector<16x128xf32> -> vector<16x128xf32>
    %12 = arith.addf %1, %11 : vector<16x128xf32>
    %c0_10 = arith.constant 0 : index
    %c0_11 = arith.constant 0 : index
    %13 = vector.load %arg5[%c0_10, %c0_11] : memref<1x128xf32, #tpu.memory_space<vmem>>, vector<1x128xf32>
    %14 = vector.broadcast %13 : vector<1x128xf32> to vector<16x128xf32>
    %15 = arith.addf %12, %14 : vector<16x128xf32>
    %c0_12 = arith.constant 0 : index
    %c0_13 = arith.constant 0 : index
    %16 = vector.load %arg6[%c0_12, %c0_13] : memref<16x128xf32, #tpu.memory_space<vmem>>, vector<16x128xf32>
    tpu.vector_store %arg6[%c0_12, %c0_13], %15 {strides = array<i32>} : memref<16x128xf32, #tpu.memory_space<vmem>>, vector<16x128xf32>,
    return
  }
  func.func @transform_0(%arg0: i32) -> (i32, i32) {
    %c0_i32 = arith.constant 0 : i32
    %c0_i32_0 = arith.constant 0 : i32
    return %arg0, %c0_i32 : i32, i32
  }
  func.func @transform_1(%arg0: i32) -> (i32, i32) {
    %c0_i32 = arith.constant 0 : i32
    %c0_i32_0 = arith.constant 0 : i32
    %c0_i32_1 = arith.constant 0 : i32
    return %c0_i32, %c0_i32_0 : i32, i32
  }
  func.func @transform_2(%arg0: i32) -> (i32, i32) {
    %c0_i32 = arith.constant 0 : i32
    %c0_i32_0 = arith.constant 0 : i32
    %c0_i32_1 = arith.constant 0 : i32
    return %c0_i32, %c0_i32_0 : i32, i32
  }
  func.func @transform_3(%arg0: i32) -> (i32, i32) {
    %c0_i32 = arith.constant 0 : i32
    %c0_i32_0 = arith.constant 0 : i32
    %c0_i32_1 = arith.constant 0 : i32
    return %c0_i32, %c0_i32_0 : i32, i32
  }
  func.func @transform_4(%arg0: i32) -> (i32, i32) {
    %c0_i32 = arith.constant 0 : i32
    %c0_i32_0 = arith.constant 0 : i32
    %c0_i32_1 = arith.constant 0 : i32
    return %c0_i32, %c0_i32_0 : i32, i32
  }
  func.func @transform_5(%arg0: i32) -> (i32, i32) {
    %c0_i32 = arith.constant 0 : i32
    %c0_i32_0 = arith.constant 0 : i32
    return %arg0, %c0_i32 : i32, i32
  }
}

</mosaic_0001>

<llo_original>
// kernel: tpu_custom_call.1
$region0: #{tpu_custom_call.1}
  #allocation0 [shape = 'u32[]', space=smem, size = 0x4, offset = 0x4, fixed_abs, tag = 'smem constant byte address 0x4 - core index']
  #allocation1 [shape = 'u32[144,128]{1,0:T(1,128)}', space=vmem, size = 0x12000, scoped, tag = 'internal scratch']
  %s0 = inlined_call_operand.hbm [shape: bf16[16,128], index: 0, kind: input, shape index: {}]
  %s1 = inlined_call_operand.hbm [shape: bf16[128,128], index: 1, kind: input, shape index: {}]
  %s2 = inlined_call_operand.vmem [shape: f32[1,128], index: 2, kind: input, shape index: {}]
  %s3 = inlined_call_operand.hbm [shape: bf16[128,128], index: 3, kind: input, shape index: {}]
  %s4 = inlined_call_operand.vmem [shape: f32[1,128], index: 4, kind: input, shape index: {}]
  %s5 = inlined_call_operand.hbm [shape: f32[16,128], index: 5, kind: output, shape index: {}]
  %s6 = sld [smem:[#allocation0]]
  $region42: #{tpu_custom_call.1} parent=0
    _
  %s8 = ssub.s32 1, %s6
  %s9 = scalar_select 0, %s8, %s6
  $region1: #{tpu_custom_call.1} parent=0
    #allocation2 [shape = 'u8[4096]{0}', space=vmem, size = 0x1000, scoped, tag = 'input window, operand 0, single buffered']
    #allocation3 [shape = 's32[1]{0}', space=sflag, size = 0x4, scoped, tag = 'scoped memory for tpu_custom_call.1']
    #allocation4 [shape = 's32[1]{0}', space=sflag, size = 0x4, scoped, tag = 'scoped memory for tpu_custom_call.1']
    #allocation5 [shape = 'u8[32768]{0}', space=vmem, size = 0x8000, scoped, tag = 'input window, operand 1, single buffered']
    #allocation6 [shape = 's32[1]{0}', space=sflag, size = 0x4, scoped, tag = 'scoped memory for tpu_custom_call.1']
    #allocation7 [shape = 'u8[32768]{0}', space=vmem, size = 0x8000, scoped, tag = 'input window, operand 3, single buffered']
    #allocation8 [shape = 'u8[8192]{0}', space=vmem, size = 0x2000, scoped, tag = 'output window, operand 0, single buffered']
    %10 = vsyncpa [#allocation3], 0
    %11 = vsyncpa [#allocation6], 0
    %12 = vsyncpa [#allocation4], 0
    // Predicated region
    $region2: #{tpu_custom_call.1} parent=1 // pred_check
      _
    $region3: #{tpu_custom_call.1} parent=1 // pred_check_branch
      %14 = sbr.rel (0) target = $region5
    $region4: #{tpu_custom_call.1} parent=1 // pred_region
      %s16 = ssub.s32 128, 128
      %17 = vsyncadd [#allocation3], %s16
      %s18 = sshll.u32 [#allocation2], 4
      %s19 = int_to_ptr.vmem [resolvable:$true] %s18
      %24 = dma.hbm_to_vmem [thread:$0]  %s0, 128, %s19, [#allocation3], 64, 64, 4
    $region5: #{tpu_custom_call.1} parent=1 // pred_fallthru
      _
    // Predicated region
    $region6: #{tpu_custom_call.1} parent=1 // pred_check
      _
    $region7: #{tpu_custom_call.1} parent=1 // pred_check_branch
      %26 = sbr.rel (0) target = $region9
    $region8: #{tpu_custom_call.1} parent=1 // pred_region
      %s28 = ssub.s32 1024, 1024
      %29 = vsyncadd [#allocation6], %s28
      %s30 = sshll.u32 [#allocation5], 4
      %s31 = int_to_ptr.vmem [resolvable:$true] %s30
      %36 = dma.hbm_to_vmem [thread:$0]  %s1, 1024, %s31, [#allocation6], 64, 64, 4
    $region9: #{tpu_custom_call.1} parent=1 // pred_fallthru
      _
    // Predicated region
    $region10: #{tpu_custom_call.1} parent=1 // pred_check
      _
    $region11: #{tpu_custom_call.1} parent=1 // pred_check_branch
      %38 = sbr.rel (0) target = $region13
    $region12: #{tpu_custom_call.1} parent=1 // pred_region
      _
    $region13: #{tpu_custom_call.1} parent=1 // pred_fallthru
      _
    // Predicated region
    $region14: #{tpu_custom_call.1} parent=1 // pred_check
      _
    $region15: #{tpu_custom_call.1} parent=1 // pred_check_branch
      %40 = sbr.rel (0) target = $region17
    $region16: #{tpu_custom_call.1} parent=1 // pred_region
      %s42 = ssub.s32 1024, 1024
      %43 = vsyncadd [#allocation6], %s42
      %s44 = sshll.u32 [#allocation7], 4
      %s45 = int_to_ptr.vmem [resolvable:$true] %s44
      %50 = dma.hbm_to_vmem [thread:$0]  %s3, 1024, %s45, [#allocation6], 64, 64, 4
    $region17: #{tpu_custom_call.1} parent=1 // pred_fallthru
      _
    // Predicated region
    $region18: #{tpu_custom_call.1} parent=1 // pred_check
      _
    $region19: #{tpu_custom_call.1} parent=1 // pred_check_branch
      %52 = sbr.rel (0) target = $region21
    $region20: #{tpu_custom_call.1} parent=1 // pred_region
      _
    $region21: #{tpu_custom_call.1} parent=1 // pred_fallthru
      _
    // Predicated region
    $region22: #{tpu_custom_call.1} parent=1 // pred_check
      _
    $region23: #{tpu_custom_call.1} parent=1 // pred_check_branch
      %54 = sbr.rel (0) target = $region25
    $region24: #{tpu_custom_call.1} parent=1 // pred_region
      %55 = dma.done [#allocation3], 128
    $region25: #{tpu_custom_call.1} parent=1 // pred_fallthru
      _
    // Predicated region
    $region26: #{tpu_custom_call.1} parent=1 // pred_check
      _
    $region27: #{tpu_custom_call.1} parent=1 // pred_check_branch
      %57 = sbr.rel (0) target = $region29
    $region28: #{tpu_custom_call.1} parent=1 // pred_region
      %58 = dma.done [#allocation6], 1024
    $region29: #{tpu_custom_call.1} parent=1 // pred_fallthru
      _
    // Predicated region
    $region30: #{tpu_custom_call.1} parent=1 // pred_check
      _
    $region31: #{tpu_custom_call.1} parent=1 // pred_check_branch
      %60 = sbr.rel (0) target = $region33
    $region32: #{tpu_custom_call.1} parent=1 // pred_region
      %61 = dma.done [#allocation6], 1024
    $region33: #{tpu_custom_call.1} parent=1 // pred_fallthru
      _
    %v63 = vld [vmem:[#allocation2] sm:$0xf]
    %v64 = vld [vmem:[#allocation2 + $0x4] sm:$0xf]
    %v65 = vld [vmem:[#allocation5] sm:$0xf]
    %v66 = vld [vmem:[#allocation5 + $0x4] sm:$0xf]
    %v67 = vld [vmem:[#allocation5 + $0x8] sm:$0xf]
    %v68 = vld [vmem:[#allocation5 + $0xc] sm:$0xf]
    %v69 = vld [vmem:[#allocation5 + $0x10] sm:$0xf]
    %v70 = vld [vmem:[#allocation5 + $0x14] sm:$0xf]
    %v71 = vld [vmem:[#allocation5 + $0x18] sm:$0xf]
    %v72 = vld [vmem:[#allocation5 + $0x1c] sm:$0xf]
    %v73 = vld [vmem:[#allocation5 + $0x20] sm:$0xf]
    %v74 = vld [vmem:[#allocation5 + $0x24] sm:$0xf]
    %v75 = vld [vmem:[#allocation5 + $0x28] sm:$0xf]
    %v76 = vld [vmem:[#allocation5 + $0x2c] sm:$0xf]
    %v77 = vld [vmem:[#allocation5 + $0x30] sm:$0xf]
    %v78 = vld [vmem:[#allocation5 + $0x34] sm:$0xf]
    %v79 = vld [vmem:[#allocation5 + $0x38] sm:$0xf]
    %v80 = vld [vmem:[#allocation5 + $0x3c] sm:$0xf]
    %v81 = vld [vmem:[%s2] sm:$0x1]
    %v83 = vlaneseq
    %v84 = vshrl.u32 %v83, 7
    %v85 = vsub.s32 0, %v84
    %v86 = vrot.slane %v81, %v85
    %v90 = vunpack.c.l.b16 %v63
    %v91 = vunpack.c.l.b16 %v64
    %v92 = vpack.c.b16 %v91, %v90
    %v110 = vunpack.c.l.b16 %v65
    %v111 = vunpack.c.l.b16 %v66
    %v112 = vunpack.c.l.b16 %v67
    %v113 = vunpack.c.l.b16 %v68
    %v114 = vunpack.c.l.b16 %v69
    %v115 = vunpack.c.l.b16 %v70
    %v116 = vunpack.c.l.b16 %v71
    %v117 = vunpack.c.l.b16 %v72
    %v118 = vunpack.c.l.b16 %v73
    %v119 = vunpack.c.l.b16 %v74
    %v120 = vunpack.c.l.b16 %v75
    %v121 = vunpack.c.l.b16 %v76
    %v122 = vunpack.c.l.b16 %v77
    %v123 = vunpack.c.l.b16 %v78
    %v124 = vunpack.c.l.b16 %v79
    %v125 = vunpack.c.l.b16 %v80
    %v126 = vpack.c.b16 %v111, %v110
    %v127 = vpack.c.b16 %v113, %v112
    %v128 = vpack.c.b16 %v115, %v114
    %v129 = vpack.c.b16 %v117, %v116
    %v130 = vpack.c.b16 %v119, %v118
    %v131 = vpack.c.b16 %v121, %v120
    %v132 = vpack.c.b16 %v123, %v122
    %v133 = vpack.c.b16 %v125, %v124
    %142 = vmatprep.subr.bf16.mxu0 0
    %143 = vmatpush1.bf16.msra.mxu0 %v126
    %144 = vmatprep.subr.bf16.mxu0 0
    %145 = vmatpush1.bf16.msra.mxu0 %v127
    %146 = vmatprep.subr.bf16.mxu0 0
    %147 = vmatpush1.bf16.msra.mxu0 %v128
    %148 = vmatprep.subr.bf16.mxu0 0
    %149 = vmatpush1.bf16.msra.mxu0 %v129
    %150 = vmatprep.subr.bf16.mxu0 0
    %151 = vmatpush1.bf16.msra.mxu0 %v130
    %152 = vmatprep.subr.bf16.mxu0 0
    %153 = vmatpush1.bf16.msra.mxu0 %v131
    %154 = vmatprep.subr.bf16.mxu0 0
    %155 = vmatpush1.bf16.msra.mxu0 %v132
    %156 = vmatprep.subr.bf16.mxu0 0
    %157 = vmatpush1.bf16.msra.mxu0 %v133
    %158 = vmatprep.subr.bf16.mxu0 0
    %159 = vmatpush1.bf16.msra.mxu0 0
    %160 = vmatprep.subr.bf16.mxu0 0
    %161 = vmatpush1.bf16.msra.mxu0 0
    %162 = vmatprep.subr.bf16.mxu0 0
    %163 = vmatpush1.bf16.msra.mxu0 0
    %164 = vmatprep.subr.bf16.mxu0 0
    %165 = vmatpush1.bf16.msra.mxu0 0
    %166 = vmatprep.subr.bf16.mxu0 0
    %167 = vmatpush1.bf16.msra.mxu0 0
    %168 = vmatprep.subr.bf16.mxu0 0
    %169 = vmatpush1.bf16.msra.mxu0 0
    %170 = vmatprep.subr.bf16.mxu0 0
    %171 = vmatpush1.bf16.msra.mxu0 0
    %172 = vmatprep.subr.bf16.mxu0 0
    %173 = vmatpush1.bf16.msra.mxu0 0
    %174 = vmatprep.mubr.bf16.mxu0 0
    %175 = vmatmul.mubr.bf16.gmra.mrb[0].mxu0 %v92
    %v176 = vpop.f32.mrb[0].mxu0
    %v177 = vadd.f32 %v86, %v176
    %v178 = vpop.f32.mrb[0].mxu0
    %v179 = vpop.f32.mrb[0].mxu0
    %v180 = vadd.f32 %v86, %v179
    %v181 = vpop.f32.mrb[0].mxu0
    %182 = vdwg.mxu0
    %v183 = vmax.f32 %v177, 0.0
    %v184 = vmax.f32 %v180, 0.0
    %v185 = vpack.c.bf16 %v184, %v183
    %v186 = vld [vmem:[#allocation7] sm:$0xf]
    %v187 = vld [vmem:[#allocation7 + $0x4] sm:$0xf]
    %v188 = vld [vmem:[#allocation7 + $0x8] sm:$0xf]
    %v189 = vld [vmem:[#allocation7 + $0xc] sm:$0xf]
    %v190 = vld [vmem:[#allocation7 + $0x10] sm:$0xf]
    %v191 = vld [vmem:[#allocation7 + $0x14] sm:$0xf]
    %v192 = vld [vmem:[#allocation7 + $0x18] sm:$0xf]
    %v193 = vld [vmem:[#allocation7 + $0x1c] sm:$0xf]
    %v194 = vld [vmem:[#allocation7 + $0x20] sm:$0xf]
    %v195 = vld [vmem:[#allocation7 + $0x24] sm:$0xf]
    %v196 = vld [vmem:[#allocation7 + $0x28] sm:$0xf]
    %v197 = vld [vmem:[#allocation7 + $0x2c] sm:$0xf]
    %v198 = vld [vmem:[#allocation7 + $0x30] sm:$0xf]
    %v199 = vld [vmem:[#allocation7 + $0x34] sm:$0xf]
    %v200 = vld [vmem:[#allocation7 + $0x38] sm:$0xf]
    %v201 = vld [vmem:[#allocation7 + $0x3c] sm:$0xf]
    %v202 = vld [vmem:[%s4] sm:$0x1]
    %v204 = vlaneseq
    %v205 = vshrl.u32 %v204, 7
    %v206 = vsub.s32 0, %v205
    %v207 = vrot.slane %v202, %v206
    %v225 = vunpack.c.l.b16 %v186
    %v226 = vunpack.c.l.b16 %v187
    %v227 = vunpack.c.l.b16 %v188
    %v228 = vunpack.c.l.b16 %v189
    %v229 = vunpack.c.l.b16 %v190
    %v230 = vunpack.c.l.b16 %v191
    %v231 = vunpack.c.l.b16 %v192
    %v232 = vunpack.c.l.b16 %v193
    %v233 = vunpack.c.l.b16 %v194
    %v234 = vunpack.c.l.b16 %v195
    %v235 = vunpack.c.l.b16 %v196
    %v236 = vunpack.c.l.b16 %v197
    %v237 = vunpack.c.l.b16 %v198
    %v238 = vunpack.c.l.b16 %v199
    %v239 = vunpack.c.l.b16 %v200
    %v240 = vunpack.c.l.b16 %v201
    %v241 = vpack.c.b16 %v226, %v225
    %v242 = vpack.c.b16 %v228, %v227
    %v243 = vpack.c.b16 %v230, %v229
    %v244 = vpack.c.b16 %v232, %v231
    %v245 = vpack.c.b16 %v234, %v233
    %v246 = vpack.c.b16 %v236, %v235
    %v247 = vpack.c.b16 %v238, %v237
    %v248 = vpack.c.b16 %v240, %v239
    %257 = vmatprep.subr.bf16.mxu0 0
    %258 = vmatpush1.bf16.msra.mxu0 %v241
    %259 = vmatprep.subr.bf16.mxu0 0
    %260 = vmatpush1.bf16.msra.mxu0 %v242
    %261 = vmatprep.subr.bf16.mxu0 0
    %262 = vmatpush1.bf16.msra.mxu0 %v243
    %263 = vmatprep.subr.bf16.mxu0 0
    %264 = vmatpush1.bf16.msra.mxu0 %v244
    %265 = vmatprep.subr.bf16.mxu0 0
    %266 = vmatpush1.bf16.msra.mxu0 %v245
    %267 = vmatprep.subr.bf16.mxu0 0
    %268 = vmatpush1.bf16.msra.mxu0 %v246
    %269 = vmatprep.subr.bf16.mxu0 0
    %270 = vmatpush1.bf16.msra.mxu0 %v247
    %271 = vmatprep.subr.bf16.mxu0 0
    %272 = vmatpush1.bf16.msra.mxu0 %v248
    %273 = vmatprep.subr.bf16.mxu0 0
    %274 = vmatpush1.bf16.msra.mxu0 0
    %275 = vmatprep.subr.bf16.mxu0 0
    %276 = vmatpush1.bf16.msra.mxu0 0
    %277 = vmatprep.subr.bf16.mxu0 0
    %278 = vmatpush1.bf16.msra.mxu0 0
    %279 = vmatprep.subr.bf16.mxu0 0
    %280 = vmatpush1.bf16.msra.mxu0 0
    %281 = vmatprep.subr.bf16.mxu0 0
    %282 = vmatpush1.bf16.msra.mxu0 0
    %283 = vmatprep.subr.bf16.mxu0 0
    %284 = vmatpush1.bf16.msra.mxu0 0
    %285 = vmatprep.subr.bf16.mxu0 0
    %286 = vmatpush1.bf16.msra.mxu0 0
    %287 = vmatprep.subr.bf16.mxu0 0
    %288 = vmatpush1.bf16.msra.mxu0 0
    %289 = vmatprep.mubr.bf16.mxu0 0
    %290 = vmatmul.mubr.bf16.gmra.mrb[0].mxu0 %v185
    %v291 = vpop.f32.mrb[0].mxu0
    %v292 = vadd.f32 %v207, %v291
    %v293 = vpop.f32.mrb[0].mxu0
    %v294 = vpop.f32.mrb[0].mxu0
    %v295 = vadd.f32 %v207, %v294
    %v296 = vpop.f32.mrb[0].mxu0
    %297 = vdwg.mxu0
    %298 = vst [vmem:[#allocation8] sm:$0xff] %v292
    %299 = vst [vmem:[#allocation8 + $0x8] sm:$0xff] %v295
    // Predicated region
    $region34: #{tpu_custom_call.1} parent=1 // pred_check
      _
    $region35: #{tpu_custom_call.1} parent=1 // pred_check_branch
      %301 = sbr.rel (0) target = $region37
    $region36: #{tpu_custom_call.1} parent=1 // pred_region
      %s303 = ssub.s32 256, 256
      %304 = vsyncadd [#allocation4], %s303
      %s305 = sshll.u32 [#allocation8], 4
      %s306 = int_to_ptr.vmem [resolvable:$true] %s305
      %311 = dma.vmem_to_hbm [thread:$0]  %s306, 256, %s5, [#allocation4], 128, 128, 8
    $region37: #{tpu_custom_call.1} parent=1 // pred_fallthru
      _
    // Predicated region
    $region38: #{tpu_custom_call.1} parent=1 // pred_check
      _
    $region39: #{tpu_custom_call.1} parent=1 // pred_check_branch
      %313 = sbr.rel (0) target = $region41
    $region40: #{tpu_custom_call.1} parent=1 // pred_region
      %314 = dma.done [#allocation4], 256
    $region41: #{tpu_custom_call.1} parent=1 // pred_fallthru
      _
    %315 = vsyncpa [#allocation3], 1
    %316 = vsyncpa [#allocation6], 1
    %317 = vsyncpa [#allocation4], 1

// kernel: tpu_custom_call.1
$region0: #{tpu_custom_call.1}
  #allocation0 [shape = 'u32[]', space=smem, size = 0x4, offset = 0x4, fixed_abs, tag = 'smem constant byte address 0x4 - core index']
  #allocation1 [shape = 'u32[144,128]{1,0:T(1,128)}', space=vmem, size = 0x12000, scoped, tag = 'internal scratch']
  %s0 = inlined_call_operand.hbm [shape: bf16[16,128], index: 0, kind: input, shape index: {}]
  %s1 = inlined_call_operand.hbm [shape: bf16[128,128], index: 1, kind: input, shape index: {}]
  %s2 = inlined_call_operand.vmem [shape: f32[1,128], index: 2, kind: input, shape index: {}]
  %s3 = inlined_call_operand.hbm [shape: bf16[128,128], index: 3, kind: input, shape index: {}]
  %s4 = inlined_call_operand.vmem [shape: f32[1,128], index: 4, kind: input, shape index: {}]
  %s5 = inlined_call_operand.hbm [shape: f32[16,128], index: 5, kind: output, shape index: {}]
  %s6 = sld [smem:[#allocation0]]
  $region42: #{tpu_custom_call.1} parent=0
    _
  %s8 = ssub.s32 1, %s6
  %s9 = scalar_select 0, %s8, %s6
  $region1: #{tpu_custom_call.1} parent=0
    #allocation2 [shape = 'u8[4096]{0}', space=vmem, size = 0x1000, scoped, tag = 'input window, operand 0, single buffered']
    #allocation3 [shape = 's32[1]{0}', space=sflag, size = 0x4, scoped, tag = 'scoped memory for tpu_custom_call.1']
    #allocation4 [shape = 's32[1]{0}', space=sflag, size = 0x4, scoped, tag = 'scoped memory for tpu_custom_call.1']
    #allocation5 [shape = 'u8[32768]{0}', space=vmem, size = 0x8000, scoped, tag = 'input window, operand 1, single buffered']
    #allocation6 [shape = 's32[1]{0}', space=sflag, size = 0x4, scoped, tag = 'scoped memory for tpu_custom_call.1']
    #allocation7 [shape = 'u8[32768]{0}', space=vmem, size = 0x8000, scoped, tag = 'input window, operand 3, single buffered']
    #allocation8 [shape = 'u8[8192]{0}', space=vmem, size = 0x2000, scoped, tag = 'output window, operand 0, single buffered']
    %10 = vsyncpa [#allocation3], 0
    %11 = vsyncpa [#allocation6], 0
    %12 = vsyncpa [#allocation4], 0
    // Predicated region
    $region2: #{tpu_custom_call.1} parent=1 // pred_check
      _
    $region3: #{tpu_custom_call.1} parent=1 // pred_check_branch
      %14 = sbr.rel (0) target = $region5
    $region4: #{tpu_custom_call.1} parent=1 // pred_region
      %s16 = ssub.s32 128, 128
      %17 = vsyncadd [#allocation3], %s16
      %s18 = sshll.u32 [#allocation2], 4
      %s19 = int_to_ptr.vmem [resolvable:$true] %s18
      %24 = dma.hbm_to_vmem [thread:$0]  %s0, 128, %s19, [#allocation3], 64, 64, 4
    $region5: #{tpu_custom_call.1} parent=1 // pred_fallthru
      _
    // Predicated region
    $region6: #{tpu_custom_call.1} parent=1 // pred_check
      _
    $region7: #{tpu_custom_call.1} parent=1 // pred_check_branch
      %26 = sbr.rel (0) target = $region9
    $region8: #{tpu_custom_call.1} parent=1 // pred_region
      %s28 = ssub.s32 1024, 1024
      %29 = vsyncadd [#allocation6], %s28
      %s30 = sshll.u32 [#allocation5], 4
      %s31 = int_to_ptr.vmem [resolvable:$true] %s30
      %36 = dma.hbm_to_vmem [thread:$0]  %s1, 1024, %s31, [#allocation6], 64, 64, 4
    $region9: #{tpu_custom_call.1} parent=1 // pred_fallthru
      _
    // Predicated region
    $region10: #{tpu_custom_call.1} parent=1 // pred_check
      _
    $region11: #{tpu_custom_call.1} parent=1 // pred_check_branch
      %38 = sbr.rel (0) target = $region13
    $region12: #{tpu_custom_call.1} parent=1 // pred_region
      _
    $region13: #{tpu_custom_call.1} parent=1 // pred_fallthru
      _
    // Predicated region
    $region14: #{tpu_custom_call.1} parent=1 // pred_check
      _
    $region15: #{tpu_custom_call.1} parent=1 // pred_check_branch
      %40 = sbr.rel (0) target = $region17
    $region16: #{tpu_custom_call.1} parent=1 // pred_region
      %s42 = ssub.s32 1024, 1024
      %43 = vsyncadd [#allocation6], %s42
      %s44 = sshll.u32 [#allocation7], 4
      %s45 = int_to_ptr.vmem [resolvable:$true] %s44
      %50 = dma.hbm_to_vmem [thread:$0]  %s3, 1024, %s45, [#allocation6], 64, 64, 4
    $region17: #{tpu_custom_call.1} parent=1 // pred_fallthru
      _
    // Predicated region
    $region18: #{tpu_custom_call.1} parent=1 // pred_check
      _
    $region19: #{tpu_custom_call.1} parent=1 // pred_check_branch
      %52 = sbr.rel (0) target = $region21
    $region20: #{tpu_custom_call.1} parent=1 // pred_region
      _
    $region21: #{tpu_custom_call.1} parent=1 // pred_fallthru
      _
    // Predicated region
    $region22: #{tpu_custom_call.1} parent=1 // pred_check
      _
    $region23: #{tpu_custom_call.1} parent=1 // pred_check_branch
      %54 = sbr.rel (0) target = $region25
    $region24: #{tpu_custom_call.1} parent=1 // pred_region
      %55 = dma.done [#allocation3], 128
    $region25: #{tpu_custom_call.1} parent=1 // pred_fallthru
      _
    // Predicated region
    $region26: #{tpu_custom_call.1} parent=1 // pred_check
      _
    $region27: #{tpu_custom_call.1} parent=1 // pred_check_branch
      %57 = sbr.rel (0) target = $region29
    $region28: #{tpu_custom_call.1} parent=1 // pred_region
      %58 = dma.done [#allocation6], 1024
    $region29: #{tpu_custom_call.1} parent=1 // pred_fallthru
      _
    // Predicated region
    $region30: #{tpu_custom_call.1} parent=1 // pred_check
      _
    $region31: #{tpu_custom_call.1} parent=1 // pred_check_branch
      %60 = sbr.rel (0) target = $region33
    $region32: #{tpu_custom_call.1} parent=1 // pred_region
      %61 = dma.done [#allocation6], 1024
    $region33: #{tpu_custom_call.1} parent=1 // pred_fallthru
      _
    %v63 = vld [vmem:[#allocation2] sm:$0xf]
    %v64 = vld [vmem:[#allocation2 + $0x4] sm:$0xf]
    %v65 = vld [vmem:[#allocation5] sm:$0xf]
    %v66 = vld [vmem:[#allocation5 + $0x4] sm:$0xf]
    %v67 = vld [vmem:[#allocation5 + $0x8] sm:$0xf]
    %v68 = vld [vmem:[#allocation5 + $0xc] sm:$0xf]
    %v69 = vld [vmem:[#allocation5 + $0x10] sm:$0xf]
    %v70 = vld [vmem:[#allocation5 + $0x14] sm:$0xf]
    %v71 = vld [vmem:[#allocation5 + $0x18] sm:$0xf]
    %v72 = vld [vmem:[#allocation5 + $0x1c] sm:$0xf]
    %v73 = vld [vmem:[#allocation5 + $0x20] sm:$0xf]
    %v74 = vld [vmem:[#allocation5 + $0x24] sm:$0xf]
    %v75 = vld [vmem:[#allocation5 + $0x28] sm:$0xf]
    %v76 = vld [vmem:[#allocation5 + $0x2c] sm:$0xf]
    %v77 = vld [vmem:[#allocation5 + $0x30] sm:$0xf]
    %v78 = vld [vmem:[#allocation5 + $0x34] sm:$0xf]
    %v79 = vld [vmem:[#allocation5 + $0x38] sm:$0xf]
    %v80 = vld [vmem:[#allocation5 + $0x3c] sm:$0xf]
    %v81 = vld [vmem:[%s2] sm:$0x1]
    %v83 = vlaneseq
    %v84 = vshrl.u32 %v83, 7
    %v85 = vsub.s32 0, %v84
    %v86 = vrot.slane %v81, %v85
    %v90 = vunpack.c.l.b16 %v63
    %v91 = vunpack.c.l.b16 %v64
    %v92 = vpack.c.b16 %v91, %v90
    %v110 = vunpack.c.l.b16 %v65
    %v111 = vunpack.c.l.b16 %v66
    %v112 = vunpack.c.l.b16 %v67
    %v113 = vunpack.c.l.b16 %v68
    %v114 = vunpack.c.l.b16 %v69
    %v115 = vunpack.c.l.b16 %v70
    %v116 = vunpack.c.l.b16 %v71
    %v117 = vunpack.c.l.b16 %v72
    %v118 = vunpack.c.l.b16 %v73
    %v119 = vunpack.c.l.b16 %v74
    %v120 = vunpack.c.l.b16 %v75
    %v121 = vunpack.c.l.b16 %v76
    %v122 = vunpack.c.l.b16 %v77
    %v123 = vunpack.c.l.b16 %v78
    %v124 = vunpack.c.l.b16 %v79
    %v125 = vunpack.c.l.b16 %v80
    %v126 = vpack.c.b16 %v111, %v110
    %v127 = vpack.c.b16 %v113, %v112
    %v128 = vpack.c.b16 %v115, %v114
    %v129 = vpack.c.b16 %v117, %v116
    %v130 = vpack.c.b16 %v119, %v118
    %v131 = vpack.c.b16 %v121, %v120
    %v132 = vpack.c.b16 %v123, %v122
    %v133 = vpack.c.b16 %v125, %v124
    %142 = vmatprep.subr.bf16.mxu0 0
    %143 = vmatpush1.bf16.msra.mxu0 %v126
    %144 = vmatprep.subr.bf16.mxu0 0
    %145 = vmatpush1.bf16.msra.mxu0 %v127
    %146 = vmatprep.subr.bf16.mxu0 0
    %147 = vmatpush1.bf16.msra.mxu0 %v128
    %148 = vmatprep.subr.bf16.mxu0 0
    %149 = vmatpush1.bf16.msra.mxu0 %v129
    %150 = vmatprep.subr.bf16.mxu0 0
    %151 = vmatpush1.bf16.msra.mxu0 %v130
    %152 = vmatprep.subr.bf16.mxu0 0
    %153 = vmatpush1.bf16.msra.mxu0 %v131
    %154 = vmatprep.subr.bf16.mxu0 0
    %155 = vmatpush1.bf16.msra.mxu0 %v132
    %156 = vmatprep.subr.bf16.mxu0 0
    %157 = vmatpush1.bf16.msra.mxu0 %v133
    %158 = vmatprep.subr.bf16.mxu0 0
    %159 = vmatpush1.bf16.msra.mxu0 0
    %160 = vmatprep.subr.bf16.mxu0 0
    %161 = vmatpush1.bf16.msra.mxu0 0
    %162 = vmatprep.subr.bf16.mxu0 0
    %163 = vmatpush1.bf16.msra.mxu0 0
    %164 = vmatprep.subr.bf16.mxu0 0
    %165 = vmatpush1.bf16.msra.mxu0 0
    %166 = vmatprep.subr.bf16.mxu0 0
    %167 = vmatpush1.bf16.msra.mxu0 0
    %168 = vmatprep.subr.bf16.mxu0 0
    %169 = vmatpush1.bf16.msra.mxu0 0
    %170 = vmatprep.subr.bf16.mxu0 0
    %171 = vmatpush1.bf16.msra.mxu0 0
    %172 = vmatprep.subr.bf16.mxu0 0
    %173 = vmatpush1.bf16.msra.mxu0 0
    %174 = vmatprep.mubr.bf16.mxu0 0
    %175 = vmatmul.mubr.bf16.gmra.mrb[0].mxu0 %v92
    %v176 = vpop.f32.mrb[0].mxu0
    %v177 = vadd.f32 %v86, %v176
    %v178 = vpop.f32.mrb[0].mxu0
    %v179 = vpop.f32.mrb[0].mxu0
    %v180 = vadd.f32 %v86, %v179
    %v181 = vpop.f32.mrb[0].mxu0
    %182 = vdwg.mxu0
    %v183 = vmax.f32 %v177, 0.0
    %v184 = vmax.f32 %v180, 0.0
    %v185 = vpack.c.bf16 %v184, %v183
    %v186 = vld [vmem:[#allocation7] sm:$0xf]
    %v187 = vld [vmem:[#allocation7 + $0x4] sm:$0xf]
    %v188 = vld [vmem:[#allocation7 + $0x8] sm:$0xf]
    %v189 = vld [vmem:[#allocation7 + $0xc] sm:$0xf]
    %v190 = vld [vmem:[#allocation7 + $0x10] sm:$0xf]
    %v191 = vld [vmem:[#allocation7 + $0x14] sm:$0xf]
    %v192 = vld [vmem:[#allocation7 + $0x18] sm:$0xf]
    %v193 = vld [vmem:[#allocation7 + $0x1c] sm:$0xf]
    %v194 = vld [vmem:[#allocation7 + $0x20] sm:$0xf]
    %v195 = vld [vmem:[#allocation7 + $0x24] sm:$0xf]
    %v196 = vld [vmem:[#allocation7 + $0x28] sm:$0xf]
    %v197 = vld [vmem:[#allocation7 + $0x2c] sm:$0xf]
    %v198 = vld [vmem:[#allocation7 + $0x30] sm:$0xf]
    %v199 = vld [vmem:[#allocation7 + $0x34] sm:$0xf]
    %v200 = vld [vmem:[#allocation7 + $0x38] sm:$0xf]
    %v201 = vld [vmem:[#allocation7 + $0x3c] sm:$0xf]
    %v202 = vld [vmem:[%s4] sm:$0x1]
    %v204 = vlaneseq
    %v205 = vshrl.u32 %v204, 7
    %v206 = vsub.s32 0, %v205
    %v207 = vrot.slane %v202, %v206
    %v225 = vunpack.c.l.b16 %v186
    %v226 = vunpack.c.l.b16 %v187
    %v227 = vunpack.c.l.b16 %v188
    %v228 = vunpack.c.l.b16 %v189
    %v229 = vunpack.c.l.b16 %v190
    %v230 = vunpack.c.l.b16 %v191
    %v231 = vunpack.c.l.b16 %v192
    %v232 = vunpack.c.l.b16 %v193
    %v233 = vunpack.c.l.b16 %v194
    %v234 = vunpack.c.l.b16 %v195
    %v235 = vunpack.c.l.b16 %v196
    %v236 = vunpack.c.l.b16 %v197
    %v237 = vunpack.c.l.b16 %v198
    %v238 = vunpack.c.l.b16 %v199
    %v239 = vunpack.c.l.b16 %v200
    %v240 = vunpack.c.l.b16 %v201
    %v241 = vpack.c.b16 %v226, %v225
    %v242 = vpack.c.b16 %v228, %v227
    %v243 = vpack.c.b16 %v230, %v229
    %v244 = vpack.c.b16 %v232, %v231
    %v245 = vpack.c.b16 %v234, %v233
    %v246 = vpack.c.b16 %v236, %v235
    %v247 = vpack.c.b16 %v238, %v237
    %v248 = vpack.c.b16 %v240, %v239
    %257 = vmatprep.subr.bf16.mxu0 0
    %258 = vmatpush1.bf16.msra.mxu0 %v241
    %259 = vmatprep.subr.bf16.mxu0 0
    %260 = vmatpush1.bf16.msra.mxu0 %v242
    %261 = vmatprep.subr.bf16.mxu0 0
    %262 = vmatpush1.bf16.msra.mxu0 %v243
    %263 = vmatprep.subr.bf16.mxu0 0
    %264 = vmatpush1.bf16.msra.mxu0 %v244
    %265 = vmatprep.subr.bf16.mxu0 0
    %266 = vmatpush1.bf16.msra.mxu0 %v245
    %267 = vmatprep.subr.bf16.mxu0 0
    %268 = vmatpush1.bf16.msra.mxu0 %v246
    %269 = vmatprep.subr.bf16.mxu0 0
    %270 = vmatpush1.bf16.msra.mxu0 %v247
    %271 = vmatprep.subr.bf16.mxu0 0
    %272 = vmatpush1.bf16.msra.mxu0 %v248
    %273 = vmatprep.subr.bf16.mxu0 0
    %274 = vmatpush1.bf16.msra.mxu0 0
    %275 = vmatprep.subr.bf16.mxu0 0
    %276 = vmatpush1.bf16.msra.mxu0 0
    %277 = vmatprep.subr.bf16.mxu0 0
    %278 = vmatpush1.bf16.msra.mxu0 0
    %279 = vmatprep.subr.bf16.mxu0 0
    %280 = vmatpush1.bf16.msra.mxu0 0
    %281 = vmatprep.subr.bf16.mxu0 0
    %282 = vmatpush1.bf16.msra.mxu0 0
    %283 = vmatprep.subr.bf16.mxu0 0
    %284 = vmatpush1.bf16.msra.mxu0 0
    %285 = vmatprep.subr.bf16.mxu0 0
    %286 = vmatpush1.bf16.msra.mxu0 0
    %287 = vmatprep.subr.bf16.mxu0 0
    %288 = vmatpush1.bf16.msra.mxu0 0
    %289 = vmatprep.mubr.bf16.mxu0 0
    %290 = vmatmul.mubr.bf16.gmra.mrb[0].mxu0 %v185
    %v291 = vpop.f32.mrb[0].mxu0
    %v292 = vadd.f32 %v207, %v291
    %v293 = vpop.f32.mrb[0].mxu0
    %v294 = vpop.f32.mrb[0].mxu0
    %v295 = vadd.f32 %v207, %v294
    %v296 = vpop.f32.mrb[0].mxu0
    %297 = vdwg.mxu0
    %298 = vst [vmem:[#allocation8] sm:$0xff] %v292
    %299 = vst [vmem:[#allocation8 + $0x8] sm:$0xff] %v295
    // Predicated region
    $region34: #{tpu_custom_call.1} parent=1 // pred_check
      _
    $region35: #{tpu_custom_call.1} parent=1 // pred_check_branch
      %301 = sbr.rel (0) target = $region37
    $region36: #{tpu_custom_call.1} parent=1 // pred_region
      %s303 = ssub.s32 256, 256
      %304 = vsyncadd [#allocation4], %s303
      %s305 = sshll.u32 [#allocation8], 4
      %s306 = int_to_ptr.vmem [resolvable:$true] %s305
      %311 = dma.vmem_to_hbm [thread:$0]  %s306, 256, %s5, [#allocation4], 128, 128, 8
    $region37: #{tpu_custom_call.1} parent=1 // pred_fallthru
      _
    // Predicated region
    $region38: #{tpu_custom_call.1} parent=1 // pred_check
      _
    $region39: #{tpu_custom_call.1} parent=1 // pred_check_branch
      %313 = sbr.rel (0) target = $region41
    $region40: #{tpu_custom_call.1} parent=1 // pred_region
      %314 = dma.done [#allocation4], 256
    $region41: #{tpu_custom_call.1} parent=1 // pred_fallthru
      _
    %315 = vsyncpa [#allocation3], 1
    %316 = vsyncpa [#allocation6], 1
    %317 = vsyncpa [#allocation4], 1

</llo_original>
